<compile_context>
chip_gen: v7x
topology: tpu7x:2x2x1
jax: 0.10.0
libtpu: 0.0.40
codegen_flags: <defaults>
</compile_context>

<pallas_src>
import functools

import jax
import jax.numpy as jnp
from jax.experimental import pallas as pl
from jax.experimental.pallas import tpu as pltpu


_NEG_LARGE = -1e30  # finite (not -inf) so exp(shifted) never sees inf - inf


def _gating_kernel(x_ref, w1_ref, b1_ref, w2_ref, b2_ref, out_ref, acc_ref, *, inv_t):
    k = pl.program_id(0)

    @pl.when(k == 0)
    def _init():
        acc_ref[...] = jnp.zeros_like(acc_ref)

    # Accumulate the partial time-sum of this (TT, B, C) tile in f32.
    acc_ref[...] += jnp.sum(x_ref[...].astype(jnp.float32), axis=0)

    @pl.when(k == pl.num_programs(0) - 1)
    def _finalize():
        pooled = acc_ref[...] * inv_t  # [B, C] mean over time

        # fc1 + tanh (MXU matmul, f32 accumulation).
        h = jnp.tanh(
            jnp.dot(pooled, w1_ref[...], preferred_element_type=jnp.float32)
            + b1_ref[...]
        )  # [B, C]

        # fc2 (expert dim padded to a lane-dense multiple of 128).
        logits = (
            jnp.dot(h, w2_ref[...], preferred_element_type=jnp.float32)
            + b2_ref[...]
        )  # [B, E_pad]

        # Numerically stable log_softmax over the last dim, in float32.
        m = jnp.max(logits, axis=-1, keepdims=True)
        shifted = logits - m
        lse = jnp.log(jnp.sum(jnp.exp(shifted), axis=-1, keepdims=True))
        out_ref[...] = (shifted - lse).astype(out_ref.dtype)


def mean_pool_gating_network(x, w1, b1, w2, b2, *, time_tile=None):
    """x: [T, B, C]; w1: [C, C]; b1: [1, C]; w2: [C, E]; b2: [1, E] -> [B, E] f32."""
    T, B, C = x.shape
    E = w2.shape[1]

    # --- Pad the expert dim to a multiple of 128 lanes (unmasked stores). ---
    e_pad = max(128, ((E + 127) // 128) * 128)
    if e_pad != E:
        w2p = jnp.pad(w2, ((0, 0), (0, e_pad - E)))
        b2p = jnp.pad(b2, ((0, 0), (0, e_pad - E)), constant_values=_NEG_LARGE)
    else:
        w2p, b2p = w2, b2

    # --- Choose a T tile: biggest divisor of T with tile <= ~4 MiB. ---------
    itemsize = jnp.dtype(x.dtype).itemsize
    row_bytes = B * C * itemsize
    if time_tile is None:
        budget = 4 * 1024 * 1024
        max_tt = max(1, budget // max(row_bytes, 1))
        tt = 1
        for d in range(1, T + 1):
            if T % d == 0 and d <= max_tt:
                tt = d
    else:
        assert T % time_tile == 0, "time_tile must divide T"
        tt = time_tile
    n_steps = T // tt

    # --- VMEM budget / cost estimate (memory-bound op). ---------------------
    x_tile_bytes = tt * row_bytes
    weight_bytes = (C * C + C + C * e_pad + e_pad) * 4
    out_bytes = B * e_pad * 4
    acc_bytes = B * C * 4
    vmem_needed = 2 * x_tile_bytes + 2 * weight_bytes + 2 * out_bytes + acc_bytes
    vmem_limit = int(min(max(vmem_needed + (2 << 20), 8 << 20), 32 << 20))

    cost = pl.CostEstimate(
        flops=int(T * B * C + 2 * B * C * C + 2 * B * C * e_pad + 5 * B * e_pad),
        transcendentals=int(B * C + B * e_pad),
        bytes_accessed=int(T * B * C * itemsize + weight_bytes + B * E * 4),
    )

    grid_spec = pltpu.PrefetchScalarGridSpec(
        num_scalar_prefetch=0,
        grid=(n_steps,),
        in_specs=[
            pl.BlockSpec((tt, B, C), lambda k: (k, 0, 0)),   # stream x over T
            pl.BlockSpec((C, C), lambda k: (0, 0)),          # w1 resident
            pl.BlockSpec((1, C), lambda k: (0, 0)),          # b1 resident
            pl.BlockSpec((C, e_pad), lambda k: (0, 0)),      # w2 (padded) resident
            pl.BlockSpec((1, e_pad), lambda k: (0, 0)),      # b2 (padded) resident
        ],
        out_specs=pl.BlockSpec((B, e_pad), lambda k: (0, 0)),
        scratch_shapes=[pltpu.VMEM((B, C), jnp.float32)],
    )

    out_padded = pl.pallas_call(
        functools.partial(_gating_kernel, inv_t=1.0 / float(T)),
        out_shape=jax.ShapeDtypeStruct((B, e_pad), jnp.float32),
        grid_spec=grid_spec,
        compiler_params=pltpu.CompilerParams(
            dimension_semantics=("arbitrary",),  # T is a reduction axis
            vmem_limit_bytes=vmem_limit,
        ),
        cost_estimate=cost,
    )(x, w1, b1, w2p, b2p)

    return out_padded[:, :E]


def _reference(x, w1, b1, w2, b2):
    pooled = jnp.mean(x.astype(jnp.float32), axis=0)
    h = jnp.tanh(pooled @ w1 + b1)
    logits = h @ w2 + b2
    return jax.nn.log_softmax(logits, axis=-1)


if __name__ == "__main__":
    # Small shapes consistent with the module's forward:
    # seq T=8, batch B=2, embed_dim C=32, num_experts E=4.
    T, B, C, E = 8, 2, 32, 4

    key = jax.random.PRNGKey(0)
    kx, kw1, kb1, kw2, kb2 = jax.random.split(key, 5)

    x = jax.random.normal(kx, (T, B, C), dtype=jnp.float32)

    # torch.nn.Linear weight is [out, in]; we store the transpose [in, out].
    w1 = jax.random.normal(kw1, (C, C), dtype=jnp.float32) * 0.1
    b1 = jax.random.normal(kb1, (1, C), dtype=jnp.float32) * 0.1
    w2 = jax.random.normal(kw2, (C, E), dtype=jnp.float32) * 0.1
    b2 = jax.random.normal(kb2, (1, E), dtype=jnp.float32) * 0.1

    ref = _reference(x, w1, b1, w2, b2)

    # 1) Auto tile selection (single grid step at these tiny shapes).
    out = jax.block_until_ready(mean_pool_gating_network(x, w1, b1, w2, b2))
    assert out.shape == (B, E)
    assert jnp.allclose(out, ref, atol=1e-5, rtol=1e-5)

    # 2) Forced multi-step T grid: exercises the pl.when init/accumulate/finalize
    #    pipeline path that production shapes would take.
    out_tiled = jax.block_until_ready(
        mean_pool_gating_network(x, w1, b1, w2, b2, time_tile=2)
    )
    assert out_tiled.shape == (B, E)
    assert jnp.allclose(out_tiled, ref, atol=1e-5, rtol=1e-5)

    print("KERNEL_OK")
</pallas_src>

<mosaic_0001>
module attributes {stable_mosaic.version = 11 : i64} {
  func.func @_gating_kernel(%arg0: i32, %arg1: memref<8x2x32xf32, #tpu.memory_space<vmem>>, %arg2: memref<32x32xf32, #tpu.memory_space<vmem>>, %arg3: memref<1x32xf32, #tpu.memory_space<vmem>>, %arg4: memref<32x128xf32, #tpu.memory_space<vmem>>, %arg5: memref<1x128xf32, #tpu.memory_space<vmem>>, %arg6: memref<2x128xf32, #tpu.memory_space<vmem>>, %arg7: memref<2x32xf32, #tpu.memory_space<vmem>>) attributes {dimension_semantics = [#tpu.dimension_semantics<arbitrary>], iteration_bounds = array<i64: 1>, scalar_prefetch = 0 : i64, scratch_operands = 1 : i64, tpu.core_type = #tpu.core_type<tc>, window_params = [{transform_indices = @transform_0, window_bounds = array<i64: 8, 2, 32>}, {pipeline_mode = #tpu.pipeline_mode<synchronous>, transform_indices = @transform_1, window_bounds = array<i64: 32, 32>}, {pipeline_mode = #tpu.pipeline_mode<synchronous>, transform_indices = @transform_2, window_bounds = array<i64: 1, 32>}, {pipeline_mode = #tpu.pipeline_mode<synchronous>, transform_indices = @transform_3, window_bounds = array<i64: 32, 128>}, {pipeline_mode = #tpu.pipeline_mode<synchronous>, transform_indices = @transform_4, window_bounds = array<i64: 1, 128>}, {pipeline_mode = #tpu.pipeline_mode<synchronous>, transform_indices = @transform_5, window_bounds = array<i64: 2, 128>}]} {
    %c0_i32 = arith.constant 0 : i32
    %0 = arith.cmpi eq, %arg0, %c0_i32 : i32
    %1 = arith.extui %0 : i1 to i32
    %c0_i32_0 = arith.constant 0 : i32
    %2 = arith.cmpi ne, %1, %c0_i32_0 : i32
    scf.if %2 {
      %cst_9 = arith.constant 0.000000e+00 : f32
      %11 = vector.broadcast %cst_9 : f32 to vector<2x32xf32>
      %c0_10 = arith.constant 0 : index
      %c0_11 = arith.constant 0 : index
      %12 = vector.load %arg7[%c0_10, %c0_11] : memref<2x32xf32, #tpu.memory_space<vmem>>, vector<2x32xf32>
      tpu.vector_store %arg7[%c0_10, %c0_11], %11 {strides = array<i32>} : memref<2x32xf32, #tpu.memory_space<vmem>>, vector<2x32xf32>,
    } else {
    }
    %c0 = arith.constant 0 : index
    %c0_1 = arith.constant 0 : index
    %3 = vector.load %arg7[%c0, %c0_1] : memref<2x32xf32, #tpu.memory_space<vmem>>, vector<2x32xf32>
    %c0_2 = arith.constant 0 : index
    %c0_3 = arith.constant 0 : index
    %c0_4 = arith.constant 0 : index
    %4 = vector.load %arg1[%c0_2, %c0_3, %c0_4] : memref<8x2x32xf32, #tpu.memory_space<vmem>>, vector<8x2x32xf32>
    %cst = arith.constant dense<0.000000e+00> : vector<2x32xf32>
    %5 = vector.multi_reduction <add>, %4, %cst [0] : vector<8x2x32xf32> to vector<2x32xf32>
    %6 = arith.addf %3, %5 : vector<2x32xf32>
    %c0_5 = arith.constant 0 : index
    %c0_6 = arith.constant 0 : index
    %7 = vector.load %arg7[%c0_5, %c0_6] : memref<2x32xf32, #tpu.memory_space<vmem>>, vector<2x32xf32>
    tpu.vector_store %arg7[%c0_5, %c0_6], %6 {strides = array<i32>} : memref<2x32xf32, #tpu.memory_space<vmem>>, vector<2x32xf32>,
    %c0_i32_7 = arith.constant 0 : i32
    %8 = arith.cmpi eq, %arg0, %c0_i32_7 : i32
    %9 = arith.extui %8 : i1 to i32
    %c0_i32_8 = arith.constant 0 : i32
    %10 = arith.cmpi ne, %9, %c0_i32_8 : i32
    scf.if %10 {
      %c0_9 = arith.constant 0 : index
      %c0_10 = arith.constant 0 : index
      %11 = vector.load %arg7[%c0_9, %c0_10] : memref<2x32xf32, #tpu.memory_space<vmem>>, vector<2x32xf32>
      %cst_11 = arith.constant 1.250000e-01 : f32
      %12 = vector.broadcast %cst_11 : f32 to vector<2x32xf32>
      %13 = arith.mulf %11, %12 : vector<2x32xf32>
      %c0_12 = arith.constant 0 : index
      %c0_13 = arith.constant 0 : index
      %14 = vector.load %arg2[%c0_12, %c0_13] : memref<32x32xf32, #tpu.memory_space<vmem>>, vector<32x32xf32>
      %cst_14 = arith.constant dense<0.000000e+00> : vector<2x32xf32>
      %15 = tpu.matmul %13, %14, %cst_14 {dimension_numbers = #tpu.dot_dimension_numbers<[1], [0], [0], [1], [0, 0, 1, 1], [], []>} : vector<2x32xf32>, vector<32x32xf32>, vector<2x32xf32> -> vector<2x32xf32>
      %c0_15 = arith.constant 0 : index
      %c0_16 = arith.constant 0 : index
      %16 = vector.load %arg3[%c0_15, %c0_16] : memref<1x32xf32, #tpu.memory_space<vmem>>, vector<1x32xf32>
      %17 = vector.broadcast %16 : vector<1x32xf32> to vector<2x32xf32>
      %18 = arith.addf %15, %17 : vector<2x32xf32>
      %19 = math.tanh %18 : vector<2x32xf32>
      %c0_17 = arith.constant 0 : index
      %c0_18 = arith.constant 0 : index
      %20 = vector.load %arg4[%c0_17, %c0_18] : memref<32x128xf32, #tpu.memory_space<vmem>>, vector<32x128xf32>
      %cst_19 = arith.constant dense<0.000000e+00> : vector<2x128xf32>
      %21 = tpu.matmul %19, %20, %cst_19 {dimension_numbers = #tpu.dot_dimension_numbers<[1], [0], [0], [1], [0, 0, 1, 1], [], []>} : vector<2x32xf32>, vector<32x128xf32>, vector<2x128xf32> -> vector<2x128xf32>
      %c0_20 = arith.constant 0 : index
      %c0_21 = arith.constant 0 : index
      %22 = vector.load %arg5[%c0_20, %c0_21] : memref<1x128xf32, #tpu.memory_space<vmem>>, vector<1x128xf32>
      %23 = vector.broadcast %22 : vector<1x128xf32> to vector<2x128xf32>
      %24 = arith.addf %21, %23 : vector<2x128xf32>
      %cst_22 = arith.constant dense<0xFF800000> : vector<2xf32>
      %25 = vector.multi_reduction <maximumf>, %24, %cst_22 [1] : vector<2x128xf32> to vector<2xf32>
      %26 = vector.shape_cast %25 : vector<2xf32> to vector<2x1xf32>
      %27 = vector.broadcast %26 : vector<2x1xf32> to vector<2x128xf32>
      %28 = arith.subf %24, %27 : vector<2x128xf32>
      %29 = math.exp %28 : vector<2x128xf32>
      %cst_23 = arith.constant dense<0.000000e+00> : vector<2xf32>
      %30 = vector.multi_reduction <add>, %29, %cst_23 [1] : vector<2x128xf32> to vector<2xf32>
      %31 = vector.shape_cast %30 : vector<2xf32> to vector<2x1xf32>
      %32 = math.log %31 : vector<2x1xf32>
      %33 = vector.broadcast %32 : vector<2x1xf32> to vector<2x128xf32>
      %34 = arith.subf %28, %33 : vector<2x128xf32>
      %c0_24 = arith.constant 0 : index
      %c0_25 = arith.constant 0 : index
      %35 = vector.load %arg6[%c0_24, %c0_25] : memref<2x128xf32, #tpu.memory_space<vmem>>, vector<2x128xf32>
      tpu.vector_store %arg6[%c0_24, %c0_25], %34 {strides = array<i32>} : memref<2x128xf32, #tpu.memory_space<vmem>>, vector<2x128xf32>,
    } else {
    }
    return
  }
  func.func @transform_0(%arg0: i32) -> (i32, i32, i32) {
    %c0_i32 = arith.constant 0 : i32
    %c0_i32_0 = arith.constant 0 : i32
    %c0_i32_1 = arith.constant 0 : i32
    return %arg0, %c0_i32, %c0_i32_0 : i32, i32, i32
  }
  func.func @transform_1(%arg0: i32) -> (i32, i32) {
    %c0_i32 = arith.constant 0 : i32
    %c0_i32_0 = arith.constant 0 : i32
    %c0_i32_1 = arith.constant 0 : i32
    return %c0_i32, %c0_i32_0 : i32, i32
  }
  func.func @transform_2(%arg0: i32) -> (i32, i32) {
    %c0_i32 = arith.constant 0 : i32
    %c0_i32_0 = arith.constant 0 : i32
    %c0_i32_1 = arith.constant 0 : i32
    return %c0_i32, %c0_i32_0 : i32, i32
  }
  func.func @transform_3(%arg0: i32) -> (i32, i32) {
    %c0_i32 = arith.constant 0 : i32
    %c0_i32_0 = arith.constant 0 : i32
    %c0_i32_1 = arith.constant 0 : i32
    return %c0_i32, %c0_i32_0 : i32, i32
  }
  func.func @transform_4(%arg0: i32) -> (i32, i32) {
    %c0_i32 = arith.constant 0 : i32
    %c0_i32_0 = arith.constant 0 : i32
    %c0_i32_1 = arith.constant 0 : i32
    return %c0_i32, %c0_i32_0 : i32, i32
  }
  func.func @transform_5(%arg0: i32) -> (i32, i32) {
    %c0_i32 = arith.constant 0 : i32
    %c0_i32_0 = arith.constant 0 : i32
    %c0_i32_1 = arith.constant 0 : i32
    return %c0_i32, %c0_i32_0 : i32, i32
  }
}

</mosaic_0001>

<llo_original>
// kernel: tpu_custom_call.1
$region0: #{tpu_custom_call.1}
  #allocation0 [shape = 'u32[]', space=smem, size = 0x4, offset = 0x4, fixed_abs, tag = 'smem constant byte address 0x4 - core index']
  #allocation1 [shape = 'u32[144,128]{1,0:T(1,128)}', space=vmem, size = 0x12000, scoped, tag = 'internal scratch']
  #allocation2 [shape = 'f32[2,32]{1,0:T(2,128)}', space=vmem, size = 0x400, scoped, tag = 'scratch operand']
  %s0 = inlined_call_operand.hbm [shape: f32[8,2,32], index: 0, kind: input, shape index: {}]
  %s1 = inlined_call_operand.hbm [shape: f32[32,32], index: 1, kind: input, shape index: {}]
  %s2 = inlined_call_operand.vmem [shape: f32[1,32], index: 2, kind: input, shape index: {}]
  %s3 = inlined_call_operand.hbm [shape: f32[32,128], index: 3, kind: input, shape index: {}]
  %s4 = inlined_call_operand.vmem [shape: f32[1,128], index: 4, kind: input, shape index: {}]
  %s5 = inlined_call_operand.hbm [shape: f32[2,128], index: 5, kind: output, shape index: {}]
  %s6 = sld [smem:[#allocation0]]
  $region50: #{tpu_custom_call.1} parent=0
    _
  %s8 = ssub.s32 1, %s6
  %s9 = scalar_select 0, %s8, %s6
  $region1: #{tpu_custom_call.1} parent=0
    #allocation3 [shape = 'u8[8192]{0}', space=vmem, size = 0x2000, scoped, tag = 'input window, operand 0, single buffered']
    #allocation4 [shape = 's32[1]{0}', space=sflag, size = 0x4, scoped, tag = 'scoped memory for tpu_custom_call.1']
    #allocation5 [shape = 's32[1]{0}', space=sflag, size = 0x4, scoped, tag = 'scoped memory for tpu_custom_call.1']
    #allocation6 [shape = 'u8[16384]{0}', space=vmem, size = 0x4000, scoped, tag = 'input window, operand 1, single buffered']
    #allocation7 [shape = 's32[1]{0}', space=sflag, size = 0x4, scoped, tag = 'scoped memory for tpu_custom_call.1']
    #allocation8 [shape = 'u8[16384]{0}', space=vmem, size = 0x4000, scoped, tag = 'input window, operand 3, single buffered']
    #allocation9 [shape = 'u8[1024]{0}', space=vmem, size = 0x400, scoped, tag = 'output window, operand 0, single buffered']
    %10 = vsyncpa [#allocation4], 0
    %11 = vsyncpa [#allocation7], 0
    %12 = vsyncpa [#allocation5], 0
    // Predicated region
    $region2: #{tpu_custom_call.1} parent=1 // pred_check
      _
    $region3: #{tpu_custom_call.1} parent=1 // pred_check_branch
      %14 = sbr.rel (0) target = $region5
    $region4: #{tpu_custom_call.1} parent=1 // pred_region
      %s16 = ssub.s32 256, 256
      %17 = vsyncadd [#allocation4], %s16
      %s18 = sshll.u32 [#allocation3], 4
      %s19 = int_to_ptr.vmem [resolvable:$true] %s18
      %24 = dma.hbm_to_vmem [thread:$0]  %s0, 256, %s19, [#allocation4], 32, 32, 2
    $region5: #{tpu_custom_call.1} parent=1 // pred_fallthru
      _
    // Predicated region
    $region6: #{tpu_custom_call.1} parent=1 // pred_check
      _
    $region7: #{tpu_custom_call.1} parent=1 // pred_check_branch
      %26 = sbr.rel (0) target = $region9
    $region8: #{tpu_custom_call.1} parent=1 // pred_region
      %s28 = ssub.s32 512, 512
      %29 = vsyncadd [#allocation7], %s28
      %s30 = sshll.u32 [#allocation6], 4
      %s31 = int_to_ptr.vmem [resolvable:$true] %s30
      %36 = dma.hbm_to_vmem [thread:$0]  %s1, 512, %s31, [#allocation7], 128, 128, 8
    $region9: #{tpu_custom_call.1} parent=1 // pred_fallthru
      _
    // Predicated region
    $region10: #{tpu_custom_call.1} parent=1 // pred_check
      _
    $region11: #{tpu_custom_call.1} parent=1 // pred_check_branch
      %38 = sbr.rel (0) target = $region13
    $region12: #{tpu_custom_call.1} parent=1 // pred_region
      _
    $region13: #{tpu_custom_call.1} parent=1 // pred_fallthru
      _
    // Predicated region
    $region14: #{tpu_custom_call.1} parent=1 // pred_check
      _
    $region15: #{tpu_custom_call.1} parent=1 // pred_check_branch
      %40 = sbr.rel (0) target = $region17
    $region16: #{tpu_custom_call.1} parent=1 // pred_region
      %s42 = ssub.s32 512, 512
      %43 = vsyncadd [#allocation7], %s42
      %s44 = sshll.u32 [#allocation8], 4
      %s45 = int_to_ptr.vmem [resolvable:$true] %s44
      %50 = dma.hbm_to_vmem [thread:$0]  %s3, 512, %s45, [#allocation7], 128, 128, 8
    $region17: #{tpu_custom_call.1} parent=1 // pred_fallthru
      _
    // Predicated region
    $region18: #{tpu_custom_call.1} parent=1 // pred_check
      _
    $region19: #{tpu_custom_call.1} parent=1 // pred_check_branch
      %52 = sbr.rel (0) target = $region21
    $region20: #{tpu_custom_call.1} parent=1 // pred_region
      _
    $region21: #{tpu_custom_call.1} parent=1 // pred_fallthru
      _
    // Predicated region
    $region22: #{tpu_custom_call.1} parent=1 // pred_check
      _
    $region23: #{tpu_custom_call.1} parent=1 // pred_check_branch
      %54 = sbr.rel (0) target = $region25
    $region24: #{tpu_custom_call.1} parent=1 // pred_region
      %55 = dma.done [#allocation4], 256
    $region25: #{tpu_custom_call.1} parent=1 // pred_fallthru
      _
    // Predicated region
    $region26: #{tpu_custom_call.1} parent=1 // pred_check
      _
    $region27: #{tpu_custom_call.1} parent=1 // pred_check_branch
      %57 = sbr.rel (0) target = $region29
    $region28: #{tpu_custom_call.1} parent=1 // pred_region
      %58 = dma.done [#allocation7], 512
    $region29: #{tpu_custom_call.1} parent=1 // pred_fallthru
      _
    // Predicated region
    $region30: #{tpu_custom_call.1} parent=1 // pred_check
      _
    $region31: #{tpu_custom_call.1} parent=1 // pred_check_branch
      %60 = sbr.rel (0) target = $region33
    $region32: #{tpu_custom_call.1} parent=1 // pred_region
      %61 = dma.done [#allocation7], 512
    $region33: #{tpu_custom_call.1} parent=1 // pred_fallthru
      _
    %p62 = scmp.eq.s32.totalorder 0, 0
    // Predicated region
    $region34: #{tpu_custom_call.1} parent=1 // pred_check
      %p63 = pneg %p62
    $region35: #{tpu_custom_call.1} parent=1 // pred_check_branch
      %65 = sbr.rel (%p63) target = $region37
    $region36: #{tpu_custom_call.1} parent=1 // pred_region
      %vm66 = vcmask 254976
      %67 = vst.msk [vmem:[#allocation2] sm:$0x3] %vm66, 0.0
    $region37: #{tpu_custom_call.1} parent=1 // pred_fallthru
      _
    %v68 = vld [vmem:[#allocation2] sm:$0x3]
    %v69 = vld [vmem:[#allocation3] sm:$0x3]
    %v70 = vld [vmem:[#allocation3 + $0x2] sm:$0x3]
    %v71 = vld [vmem:[#allocation3 + $0x4] sm:$0x3]
    %v72 = vld [vmem:[#allocation3 + $0x6] sm:$0x3]
    %v73 = vld [vmem:[#allocation3 + $0x8] sm:$0x3]
    %v74 = vld [vmem:[#allocation3 + $0xa] sm:$0x3]
    %v75 = vld [vmem:[#allocation3 + $0xc] sm:$0x3]
    %v76 = vld [vmem:[#allocation3 + $0xe] sm:$0x3]
    %vm77 = vcmask 254976
    %v78 = vsel %vm77, %v69, 0.0
    %v79 = vsel %vm77, %v70, 0.0
    %v80 = vadd.f32 %v78, %v79
    %v81 = vsel %vm77, %v71, 0.0
    %v82 = vadd.f32 %v80, %v81
    %v83 = vsel %vm77, %v72, 0.0
    %v84 = vadd.f32 %v82, %v83
    %v85 = vsel %vm77, %v73, 0.0
    %v86 = vadd.f32 %v84, %v85
    %v87 = vsel %vm77, %v74, 0.0
    %v88 = vadd.f32 %v86, %v87
    %v89 = vsel %vm77, %v75, 0.0
    %v90 = vadd.f32 %v88, %v89
    %v91 = vsel %vm77, %v76, 0.0
    %v92 = vadd.f32 %v90, %v91
    %v93 = vadd.f32 %v68, %v92
    %94 = vst.msk [vmem:[#allocation2] sm:$0x3] %vm77, %v93
    // Predicated region
    $region38: #{tpu_custom_call.1} parent=1 // pred_check
      %p95 = pneg %p62
    $region39: #{tpu_custom_call.1} parent=1 // pred_check_branch
      %97 = sbr.rel (%p95) target = $region41
    $region40: #{tpu_custom_call.1} parent=1 // pred_region
      %v98 = vld [vmem:[#allocation2] sm:$0x3]
      %v99 = vmul.f32 %v98, 0.125
      %v100 = vld [vmem:[#allocation6] sm:$0xff]
      %v101 = vld [vmem:[#allocation6 + $0x8] sm:$0xff]
      %v102 = vld [vmem:[#allocation6 + $0x10] sm:$0xff]
      %v103 = vld [vmem:[#allocation6 + $0x18] sm:$0xff]
      %v104 = vld [vmem:[%s2] sm:$0x1]
      %v106 = vlaneseq
      %v107 = vshrl.u32 %v106, 7
      %v108 = vsub.s32 0, %v107
      %v109 = vrot.slane %v104, %v108
      %vm111 = vcmask 261120
      %v113 = vsel %vm111, %v99, 0
      %115 = vmatprep.subr.mxu0 0.0
      %116 = vmatpush1.msra.mxu0 %v100
      %117 = vmatprep.subr.mxu0 0.0
      %118 = vmatpush1.msra.mxu0 %v101
      %119 = vmatprep.subr.mxu0 0.0
      %120 = vmatpush1.msra.mxu0 %v102
      %121 = vmatprep.subr.mxu0 0.0
      %122 = vmatpush1.msra.mxu0 %v103
      %123 = vmatprep.subr.mxu0 0.0
      %124 = vmatpush1.msra.mxu0 0.0
      %125 = vmatprep.subr.mxu0 0.0
      %126 = vmatpush1.msra.mxu0 0.0
      %127 = vmatprep.subr.mxu0 0.0
      %128 = vmatpush1.msra.mxu0 0.0
      %129 = vmatprep.subr.mxu0 0.0
      %130 = vmatpush1.msra.mxu0 0.0
      %131 = vmatprep.subr.mxu0 0.0
      %132 = vmatpush1.msra.mxu0 0.0
      %133 = vmatprep.subr.mxu0 0.0
      %134 = vmatpush1.msra.mxu0 0.0
      %135 = vmatprep.subr.mxu0 0.0
      %136 = vmatpush1.msra.mxu0 0.0
      %137 = vmatprep.subr.mxu0 0.0
      %138 = vmatpush1.msra.mxu0 0.0
      %139 = vmatprep.subr.mxu0 0.0
      %140 = vmatpush1.msra.mxu0 0.0
      %141 = vmatprep.subr.mxu0 0.0
      %142 = vmatpush1.msra.mxu0 0.0
      %143 = vmatprep.subr.mxu0 0.0
      %144 = vmatpush1.msra.mxu0 0.0
      %145 = vmatprep.subr.mxu0 0.0
      %146 = vmatpush1.msra.mxu0 0.0
      %147 = vmatprep.subr.mxu0 0.0
      %148 = vmatpush1.msra.mxu0 0.0
      %149 = vmatprep.subr.mxu0 0.0
      %150 = vmatpush1.msra.mxu0 0.0
      %151 = vmatprep.subr.mxu0 0.0
      %152 = vmatpush1.msra.mxu0 0.0
      %153 = vmatprep.subr.mxu0 0.0
      %154 = vmatpush1.msra.mxu0 0.0
      %155 = vmatprep.subr.mxu0 0.0
      %156 = vmatpush1.msra.mxu0 0.0
      %157 = vmatprep.subr.mxu0 0.0
      %158 = vmatpush1.msra.mxu0 0.0
      %159 = vmatprep.subr.mxu0 0.0
      %160 = vmatpush1.msra.mxu0 0.0
      %161 = vmatprep.subr.mxu0 0.0
      %162 = vmatpush1.msra.mxu0 0.0
      %163 = vmatprep.subr.mxu0 0.0
      %164 = vmatpush1.msra.mxu0 0.0
      %165 = vmatprep.subr.mxu0 0.0
      %166 = vmatpush1.msra.mxu0 0.0
      %167 = vmatprep.subr.mxu0 0.0
      %168 = vmatpush1.msra.mxu0 0.0
      %169 = vmatprep.subr.mxu0 0.0
      %170 = vmatpush1.msra.mxu0 0.0
      %171 = vmatprep.subr.mxu0 0.0
      %172 = vmatpush1.msra.mxu0 0.0
      %173 = vmatprep.subr.mxu0 0.0
      %174 = vmatpush1.msra.mxu0 0.0
      %175 = vmatprep.subr.mxu0 0.0
      %176 = vmatpush1.msra.mxu0 0.0
      %177 = vmatprep.subr.mxu0 0.0
      %178 = vmatpush1.msra.mxu0 0.0
      %179 = vmatprep.mubr.f32.mxu0 0.0
      %180 = vmatmul.mubr.f32.gmra.mrb[0].mxu0 %v113
      %v181 = vpop.f32.mrb[0].mxu0
      %v182 = vadd.f32 %v109, %v181
      %v183 = vpop.f32.mrb[0].mxu0
      %184 = vdwg.mxu0
      %v185 = vtanh.pop %v182
      %v186 = vld [vmem:[#allocation8] sm:$0xff]
      %v187 = vld [vmem:[#allocation8 + $0x8] sm:$0xff]
      %v188 = vld [vmem:[#allocation8 + $0x10] sm:$0xff]
      %v189 = vld [vmem:[#allocation8 + $0x18] sm:$0xff]
      %v190 = vld [vmem:[%s4] sm:$0x1]
      %v192 = vlaneseq
      %v193 = vshrl.u32 %v192, 7
      %v194 = vsub.s32 0, %v193
      %v195 = vrot.slane %v190, %v194
      %v198 = vsel %vm111, %v185, 0
      %200 = vmatprep.subr.mxu0 0.0
      %201 = vmatpush1.msra.mxu0 %v186
      %202 = vmatprep.subr.mxu0 0.0
      %203 = vmatpush1.msra.mxu0 %v187
      %204 = vmatprep.subr.mxu0 0.0
      %205 = vmatpush1.msra.mxu0 %v188
      %206 = vmatprep.subr.mxu0 0.0
      %207 = vmatpush1.msra.mxu0 %v189
      %208 = vmatprep.subr.mxu0 0.0
      %209 = vmatpush1.msra.mxu0 0.0
      %210 = vmatprep.subr.mxu0 0.0
      %211 = vmatpush1.msra.mxu0 0.0
      %212 = vmatprep.subr.mxu0 0.0
      %213 = vmatpush1.msra.mxu0 0.0
      %214 = vmatprep.subr.mxu0 0.0
      %215 = vmatpush1.msra.mxu0 0.0
      %216 = vmatprep.subr.mxu0 0.0
      %217 = vmatpush1.msra.mxu0 0.0
      %218 = vmatprep.subr.mxu0 0.0
      %219 = vmatpush1.msra.mxu0 0.0
      %220 = vmatprep.subr.mxu0 0.0
      %221 = vmatpush1.msra.mxu0 0.0
      %222 = vmatprep.subr.mxu0 0.0
      %223 = vmatpush1.msra.mxu0 0.0
      %224 = vmatprep.subr.mxu0 0.0
      %225 = vmatpush1.msra.mxu0 0.0
      %226 = vmatprep.subr.mxu0 0.0
      %227 = vmatpush1.msra.mxu0 0.0
      %228 = vmatprep.subr.mxu0 0.0
      %229 = vmatpush1.msra.mxu0 0.0
      %230 = vmatprep.subr.mxu0 0.0
      %231 = vmatpush1.msra.mxu0 0.0
      %232 = vmatprep.subr.mxu0 0.0
      %233 = vmatpush1.msra.mxu0 0.0
      %234 = vmatprep.subr.mxu0 0.0
      %235 = vmatpush1.msra.mxu0 0.0
      %236 = vmatprep.subr.mxu0 0.0
      %237 = vmatpush1.msra.mxu0 0.0
      %238 = vmatprep.subr.mxu0 0.0
      %239 = vmatpush1.msra.mxu0 0.0
      %240 = vmatprep.subr.mxu0 0.0
      %241 = vmatpush1.msra.mxu0 0.0
      %242 = vmatprep.subr.mxu0 0.0
      %243 = vmatpush1.msra.mxu0 0.0
      %244 = vmatprep.subr.mxu0 0.0
      %245 = vmatpush1.msra.mxu0 0.0
      %246 = vmatprep.subr.mxu0 0.0
      %247 = vmatpush1.msra.mxu0 0.0
      %248 = vmatprep.subr.mxu0 0.0
      %249 = vmatpush1.msra.mxu0 0.0
      %250 = vmatprep.subr.mxu0 0.0
      %251 = vmatpush1.msra.mxu0 0.0
      %252 = vmatprep.subr.mxu0 0.0
      %253 = vmatpush1.msra.mxu0 0.0
      %254 = vmatprep.subr.mxu0 0.0
      %255 = vmatpush1.msra.mxu0 0.0
      %256 = vmatprep.subr.mxu0 0.0
      %257 = vmatpush1.msra.mxu0 0.0
      %258 = vmatprep.subr.mxu0 0.0
      %259 = vmatpush1.msra.mxu0 0.0
      %260 = vmatprep.subr.mxu0 0.0
      %261 = vmatpush1.msra.mxu0 0.0
      %262 = vmatprep.subr.mxu0 0.0
      %263 = vmatpush1.msra.mxu0 0.0
      %264 = vmatprep.mubr.f32.mxu0 0.0
      %265 = vmatmul.mubr.f32.gmra.mrb[0].mxu0 %v198
      %v266 = vpop.f32.mrb[0].mxu0
      %v267 = vadd.f32 %v195, %v266
      %v268 = vpop.f32.mrb[0].mxu0
      %269 = vdwg.mxu0
      %vm270 = vcmask 1041408
      %v271 = vsel %vm270, %v267, -inf
      %272 = vmax.xlane.f32.xlu0 %v271
      %v273 = vpop.xlane.xlu0 %272
      %v274 = vsub.f32 %v267, %v273
      %v275 = vmul.f32 %v274, 1.442695
      %v276 = vpow.pop %v275
      %v277 = vsel %vm270, %v276, 0.0
      %278 = vadd.xlane.f32.xlu0 %v277
      %v279 = vpop.xlane.xlu0 %278
      %v280 = vlog2.pop %v279
      %v281 = vmul.f32 %v280, 0.6931472
      %v282 = vsub.f32 %v274, %v281
      %283 = vst [vmem:[#allocation9] sm:$0x3] %v282
    $region41: #{tpu_custom_call.1} parent=1 // pred_fallthru
      _
    // Predicated region
    $region42: #{tpu_custom_call.1} parent=1 // pred_check
      _
    $region43: #{tpu_custom_call.1} parent=1 // pred_check_branch
      %285 = sbr.rel (0) target = $region45
    $region44: #{tpu_custom_call.1} parent=1 // pred_region
      %s287 = ssub.s32 32, 32
      %288 = vsyncadd [#allocation5], %s287
      %s290 = sshll.u32 [#allocation9], 4
      %s291 = int_to_ptr.vmem [resolvable:$true] %s290
      %293 = dma.vmem_to_hbm [thread:$0]  %s291, 32, %s5, [#allocation5]
    $region45: #{tpu_custom_call.1} parent=1 // pred_fallthru
      _
    // Predicated region
    $region46: #{tpu_custom_call.1} parent=1 // pred_check
      _
    $region47: #{tpu_custom_call.1} parent=1 // pred_check_branch
      %295 = sbr.rel (0) target = $region49
    $region48: #{tpu_custom_call.1} parent=1 // pred_region
      %296 = dma.done [#allocation5], 32
    $region49: #{tpu_custom_call.1} parent=1 // pred_fallthru
      _
    %297 = vsyncpa [#allocation4], 1
    %298 = vsyncpa [#allocation7], 1
    %299 = vsyncpa [#allocation5], 1

</llo_original>
